<compile_context>
chip_gen: v6e
topology: v6e:2x2x1
jax: 0.10.0
libtpu: 0.0.40
codegen_flags: <defaults>
</compile_context>

<pallas_src>
import jax
import jax.numpy as jnp
from jax.experimental import pallas as pl
from jax.experimental.pallas import tpu as pltpu


# ----------------------------------------------------------------------------
# Pallas kernel: streamed  sum_{s,h} hidden[n,s,h] * v[n,h]  ->  logits
# ----------------------------------------------------------------------------
def _clf_logit_kernel(hidden_ref, v_ref, b_ref, logits_ref, acc_ref):
    """One (N-tile, S-tile) grid step.

    hidden_ref : [tN, tS, H]  encoder last_hidden_state tile (bf16 or f32)
    v_ref      : [tN, H] f32  keep_mask * cls_w / S (dropout + mean + linear folded)
    b_ref      : [1, 1]  f32  cls_layer bias (SMEM scalar)
    logits_ref : [tN, 1] f32  clf_predict_logits
    acc_ref    : [tN, 1] f32  running logit accumulator over the sequence axis
    """
    s_idx = pl.program_id(1)

    @pl.when(s_idx == 0)
    def _init():
        acc_ref[...] = jnp.zeros_like(acc_ref)

    # f32 accumulation of the sequence partial sum; the bf16->f32 upcast is folded into
    # the reduction (no separate full-tile f32 copy is requested).
    part = jnp.sum(hidden_ref[...], axis=1, dtype=jnp.float32)          # [tN, H]
    # Linear head collapsed to a VPU multiply + lane reduce (MXU stays idle; overlaps
    # with the streaming hidden DMA).
    acc_ref[...] += jnp.sum(part * v_ref[...], axis=-1, keepdims=True)  # [tN, 1]

    @pl.when(s_idx == pl.num_programs(1) - 1)
    def _finalize():
        logits_ref[...] = acc_ref[...] + b_ref[0, 0]


# ----------------------------------------------------------------------------
# Tiling helpers
# ----------------------------------------------------------------------------
def _sublane_multiple(dtype):
    """Sublane packing multiple for the second-to-last tile dim (f32=8, bf16=16, 8-bit=32)."""
    return {4: 8, 2: 16, 1: 32}.get(jnp.dtype(dtype).itemsize, 8)


def _pick_tile(dim, pref, mult):
    """Largest divisor of `dim` that is a multiple of `mult` and <= pref; else the full dim."""
    if dim <= mult or dim % mult != 0:
        return dim
    t = int(min(pref, dim))
    t -= t % mult
    while t >= mult:
        if dim % t == 0:
            return t
        t -= mult
    return dim


def clf_head_pallas(hidden, v, bias, *, tile_n=None, tile_s=None, vmem_budget_bytes=None):
    """hidden: [N,S,H] (bf16/f32); v: [N,H] f32 (= keep_mask * w / S); bias: [1,1] f32.
    Returns clf_predict_logits [N,1] f32."""
    N, S, H = hidden.shape
    itemsize = jnp.dtype(hidden.dtype).itemsize
    sub = _sublane_multiple(hidden.dtype)

    # Generation-aware VMEM budget: large blocks on 128 MiB parts (v5e/v6e), tighter on
    # v7x (64 MiB per TensorCore, but 2-4x the HBM bandwidth).
    if vmem_budget_bytes is None:
        try:
            cap = int(pltpu.get_tpu_info().vmem_capacity_bytes)
        except Exception:
            cap = 64 << 20
        vmem_budget_bytes = (56 << 20) if cap >= (96 << 20) else (32 << 20)

    def fits(tn, ts):
        return (2 * tn * ts * H * itemsize    # hidden double buffer (dominant)
                + 2 * tn * H * 4              # v double buffer
                + 4 * tn * 4                  # acc scratch + logits buffers
                ) <= vmem_budget_bytes

    if tile_n is None:
        # Moderate N tile; cap so the N axis has >= 2 tiles (keeps both v7x TCs busy).
        tile_n = _pick_tile(N, min(128, max(8, N // 2)), 8)
    if tile_s is None:
        # Maximize the S tile under the budget at this tile_n (longest contiguous DMA).
        avail = max(0, vmem_budget_bytes - 2 * tile_n * H * 4)
        max_ts = max(sub, avail // max(1, 2 * tile_n * H * itemsize))
        tile_s = _pick_tile(S, max_ts, sub)
    # Ragged / oversize fallback (e.g. S not sublane-divisible -> full-S block): shrink
    # tile_n until the double-buffered footprint fits the budget.
    while tile_n > 8 and not fits(tile_n, tile_s):
        smaller = _pick_tile(N, tile_n - 8, 8)
        if smaller >= tile_n:
            break
        tile_n = smaller

    grid = (N // tile_n, S // tile_s)

    flops = N * S * H + 2 * N * H * grid[1] + N
    bytes_accessed = N * S * H * itemsize + N * H * 4 + N * 4 + 4
    cost = pl.CostEstimate(flops=flops, transcendentals=0, bytes_accessed=bytes_accessed)

    return pl.pallas_call(
        _clf_logit_kernel,
        grid=grid,
        in_specs=[
            pl.BlockSpec((tile_n, tile_s, H), lambda i, j: (i, j, 0)),   # hidden [N,S,H]
            pl.BlockSpec((tile_n, H), lambda i, j: (i, 0)),              # v [N,H]
            pl.BlockSpec(memory_space=pltpu.MemorySpace.SMEM),           # bias scalar
        ],
        out_specs=pl.BlockSpec((tile_n, 1), lambda i, j: (i, 0)),
        out_shape=jax.ShapeDtypeStruct((N, 1), jnp.float32),
        scratch_shapes=[pltpu.VMEM((tile_n, 1), jnp.float32)],
        compiler_params=pltpu.CompilerParams(
            dimension_semantics=("parallel", "arbitrary"),
            vmem_limit_bytes=vmem_budget_bytes + (8 << 20)),
        cost_estimate=cost,
    )(hidden, v, bias)


# ----------------------------------------------------------------------------
# Module-level forward (numeric part of T5_Multitask_Relation_Concat.forward)
# ----------------------------------------------------------------------------
def t5_multitask_relation_concat_forward(clf_hidden, clf_labels, cls_w, cls_b, *,
                                         batch, sample_size, dropout_rng=None,
                                         training=True, dropout_rate=0.1,
                                         tile_n=None, tile_s=None):
    N, S, H = clf_hidden.shape

    # nn.Dropout(0.1) on the pooled embedding: keep mask (with 1/(1-p) folded in).
    # TODO(synk): torch-bit-exact dropout RNG is not reproduced (different generators).
    if training and dropout_rate > 0.0:
        if dropout_rng is None:
            dropout_rng = jax.random.PRNGKey(0)
        keep = jax.random.bernoulli(dropout_rng, 1.0 - dropout_rate, (N, H))
        keep_mask = keep.astype(jnp.float32) * jnp.float32(1.0 / (1.0 - dropout_rate))
    else:
        keep_mask = jnp.ones((N, H), jnp.float32)

    # Mean-pool, dropout and the Linear(H,1) weight are all linear -> fold into one
    # per-row vector so the kernel is a single streamed multiply-reduce.
    v = keep_mask * cls_w.reshape(1, H).astype(jnp.float32) * jnp.float32(1.0 / S)

    logits = clf_head_pallas(clf_hidden, v, cls_b.reshape(1, 1).astype(jnp.float32),
                             tile_n=tile_n, tile_s=tile_s)

    # BCEWithLogitsLoss (mean reduction), numerically stable form, from kernel logits.
    y = clf_labels.reshape(-1, 1).astype(jnp.float32)
    z = logits
    per_example = jnp.maximum(z, 0.0) - z * y + jnp.log1p(jnp.exp(-jnp.abs(z)))
    clf_loss = jnp.mean(per_example)

    # torch.reshape(clf_predict_logits, (B, sample_size, -1)).squeeze(2)
    clf_predict_logits = logits.reshape(batch, sample_size)
    # filter condition of filter_candidates_by_classification_results (BCE branch)
    filter_mask = clf_predict_logits > 0.0

    # TODO(synk): gen_loss = self.t5(tokenized concatenated string inputs, labels=gen_labels)['loss']
    # needs the pretrained T5 + tokenizer + Python string ops; not representable as a kernel.
    gen_loss = jnp.float32(0.0)
    total_loss = gen_loss + clf_loss
    return total_loss, clf_predict_logits, filter_mask


# pure-JAX reference for the classification head (given an explicit keep mask)
def _reference(clf_hidden, keep_mask, clf_labels, cls_w, cls_b):
    emb = jnp.mean(clf_hidden.astype(jnp.float32), axis=1) * keep_mask
    z = emb @ cls_w + cls_b.reshape(1, 1)
    y = clf_labels.reshape(-1, 1).astype(jnp.float32)
    per = jnp.maximum(z, 0.0) - z * y + jnp.log1p(jnp.exp(-jnp.abs(z)))
    return z, jnp.mean(per)


if __name__ == "__main__":
    # Small shapes consistent with the module: batch=2, sample_size=8 -> N=16 clf rows,
    # seq=32, hidden=128 (lane-aligned stand-in for the T5 hidden size).
    B, SAMPLE, S, H = 2, 8, 32, 128
    N = B * SAMPLE

    key = jax.random.PRNGKey(0)
    k_h, k_l, k_w, k_b = jax.random.split(key, 4)

    # synthetic T5 encoder last_hidden_state for input_ids_clf (bf16 halves HBM bytes)
    clf_hidden = jax.random.normal(k_h, (N, S, H), jnp.float32).astype(jnp.bfloat16)
    clf_labels = jax.random.bernoulli(k_l, 0.5, (N,)).astype(jnp.float32)
    # cls_layer = nn.Linear(hidden_size, 1)
    cls_w = (jax.random.normal(k_w, (H, 1), jnp.float32) / jnp.sqrt(H)).astype(jnp.float32)
    cls_b = (jax.random.normal(k_b, (1, 1), jnp.float32) * 0.01).astype(jnp.float32)

    # eval-mode check with heuristic tiles (dropout disabled -> matches reference)
    total_eval, logits_eval, mask_eval = t5_multitask_relation_concat_forward(
        clf_hidden, clf_labels, cls_w, cls_b,
        batch=B, sample_size=SAMPLE, training=False)
    ones = jnp.ones((N, H), jnp.float32)
    ref_z, ref_loss = _reference(clf_hidden, ones, clf_labels, cls_w, cls_b)
    assert jnp.allclose(logits_eval.reshape(-1, 1), ref_z, atol=1e-3, rtol=1e-3)
    assert jnp.allclose(total_eval, ref_loss, atol=1e-3, rtol=1e-3)
    assert bool(jnp.all(mask_eval == (logits_eval > 0.0)))

    # training-mode check with a known dropout mask (p=0.1); forced tiles give a 2x2
    # grid (exercises both the parallel N axis and the streamed S accumulation).
    drop_key = jax.random.PRNGKey(1234)
    total_tr, logits_tr, filt_mask = t5_multitask_relation_concat_forward(
        clf_hidden, clf_labels, cls_w, cls_b,
        batch=B, sample_size=SAMPLE, training=True, dropout_rng=drop_key,
        tile_n=8, tile_s=16)
    keep_ref = (jax.random.bernoulli(drop_key, 1.0 - 0.1, (N, H)).astype(jnp.float32)
                * jnp.float32(1.0 / (1.0 - 0.1)))
    ref_z_tr, ref_loss_tr = _reference(clf_hidden, keep_ref, clf_labels, cls_w, cls_b)
    assert jnp.allclose(logits_tr.reshape(-1, 1), ref_z_tr, atol=1e-3, rtol=1e-3)
    assert jnp.allclose(total_tr, ref_loss_tr, atol=1e-3, rtol=1e-3)

    jax.block_until_ready((total_tr, logits_tr, filt_mask))
    print("KERNEL_OK")
</pallas_src>

<mosaic_0001>
module attributes {stable_mosaic.version = 11 : i64} {
  func.func @_clf_logit_kernel(%arg0: i32, %arg1: i32, %arg2: memref<8x32x128xbf16, #tpu.memory_space<vmem>>, %arg3: memref<8x128xf32, #tpu.memory_space<vmem>>, %arg4: memref<1x1xf32, #tpu.memory_space<smem>>, %arg5: memref<8x1xf32, #tpu.memory_space<vmem>>, %arg6: memref<8x1xf32, #tpu.memory_space<vmem>>) attributes {dimension_semantics = [#tpu.dimension_semantics<parallel>, #tpu.dimension_semantics<arbitrary>], iteration_bounds = array<i64: 2, 1>, scalar_prefetch = 0 : i64, scratch_operands = 1 : i64, tpu.core_type = #tpu.core_type<tc>, window_params = [{transform_indices = @transform_0, window_bounds = array<i64: 8, 32, 128>}, {transform_indices = @transform_1, window_bounds = array<i64: 8, 128>}, {transform_indices = @transform_2, window_bounds = array<i64: 1, 1>}, {transform_indices = @transform_3, window_bounds = array<i64: 8, 1>}]} {
    %c0_i32 = arith.constant 0 : i32
    %0 = arith.cmpi eq, %arg1, %c0_i32 : i32
    %1 = arith.extui %0 : i1 to i32
    %c0_i32_0 = arith.constant 0 : i32
    %2 = arith.cmpi ne, %1, %c0_i32_0 : i32
    scf.if %2 {
      %cst_12 = arith.constant 0.000000e+00 : f32
      %16 = vector.broadcast %cst_12 : f32 to vector<8x1xf32>
      %c0_13 = arith.constant 0 : index
      %c0_14 = arith.constant 0 : index
      %17 = vector.load %arg6[%c0_13, %c0_14] : memref<8x1xf32, #tpu.memory_space<vmem>>, vector<8x1xf32>
      tpu.vector_store %arg6[%c0_13, %c0_14], %16 {strides = array<i32>} : memref<8x1xf32, #tpu.memory_space<vmem>>, vector<8x1xf32>,
    } else {
    }
    %c0 = arith.constant 0 : index
    %c0_1 = arith.constant 0 : index
    %c0_2 = arith.constant 0 : index
    %3 = vector.load %arg2[%c0, %c0_1, %c0_2] : memref<8x32x128xbf16, #tpu.memory_space<vmem>>, vector<8x32x128xbf16>
    %4 = arith.extf %3 : vector<8x32x128xbf16> to vector<8x32x128xf32>
    %cst = arith.constant dense<0.000000e+00> : vector<8x128xf32>
    %5 = vector.multi_reduction <add>, %4, %cst [1] : vector<8x32x128xf32> to vector<8x128xf32>
    %c0_3 = arith.constant 0 : index
    %c0_4 = arith.constant 0 : index
    %6 = vector.load %arg6[%c0_3, %c0_4] : memref<8x1xf32, #tpu.memory_space<vmem>>, vector<8x1xf32>
    %c0_5 = arith.constant 0 : index
    %c0_6 = arith.constant 0 : index
    %7 = vector.load %arg3[%c0_5, %c0_6] : memref<8x128xf32, #tpu.memory_space<vmem>>, vector<8x128xf32>
    %8 = arith.mulf %5, %7 : vector<8x128xf32>
    %cst_7 = arith.constant dense<0.000000e+00> : vector<8xf32>
    %9 = vector.multi_reduction <add>, %8, %cst_7 [1] : vector<8x128xf32> to vector<8xf32>
    %10 = vector.shape_cast %9 : vector<8xf32> to vector<8x1xf32>
    %11 = arith.addf %6, %10 : vector<8x1xf32>
    %c0_8 = arith.constant 0 : index
    %c0_9 = arith.constant 0 : index
    %12 = vector.load %arg6[%c0_8, %c0_9] : memref<8x1xf32, #tpu.memory_space<vmem>>, vector<8x1xf32>
    tpu.vector_store %arg6[%c0_8, %c0_9], %11 {strides = array<i32>} : memref<8x1xf32, #tpu.memory_space<vmem>>, vector<8x1xf32>,
    %c0_i32_10 = arith.constant 0 : i32
    %13 = arith.cmpi eq, %arg1, %c0_i32_10 : i32
    %14 = arith.extui %13 : i1 to i32
    %c0_i32_11 = arith.constant 0 : i32
    %15 = arith.cmpi ne, %14, %c0_i32_11 : i32
    scf.if %15 {
      %c0_12 = arith.constant 0 : index
      %c0_13 = arith.constant 0 : index
      %16 = vector.load %arg6[%c0_12, %c0_13] : memref<8x1xf32, #tpu.memory_space<vmem>>, vector<8x1xf32>
      %c0_14 = arith.constant 0 : index
      %c0_15 = arith.constant 0 : index
      %17 = memref.load %arg4[%c0_14, %c0_15] : memref<1x1xf32, #tpu.memory_space<smem>>
      %18 = vector.broadcast %17 : f32 to vector<8x1xf32>
      %19 = arith.addf %16, %18 : vector<8x1xf32>
      %c0_16 = arith.constant 0 : index
      %c0_17 = arith.constant 0 : index
      %20 = vector.load %arg5[%c0_16, %c0_17] : memref<8x1xf32, #tpu.memory_space<vmem>>, vector<8x1xf32>
      tpu.vector_store %arg5[%c0_16, %c0_17], %19 {strides = array<i32>} : memref<8x1xf32, #tpu.memory_space<vmem>>, vector<8x1xf32>,
    } else {
    }
    return
  }
  func.func @transform_0(%arg0: i32, %arg1: i32) -> (i32, i32, i32) {
    %c0_i32 = arith.constant 0 : i32
    %c0_i32_0 = arith.constant 0 : i32
    return %arg0, %arg1, %c0_i32 : i32, i32, i32
  }
  func.func @transform_1(%arg0: i32, %arg1: i32) -> (i32, i32) {
    %c0_i32 = arith.constant 0 : i32
    %c0_i32_0 = arith.constant 0 : i32
    return %arg0, %c0_i32 : i32, i32
  }
  func.func @transform_2(%arg0: i32, %arg1: i32) -> (i32, i32) {
    %c0_i32 = arith.constant 0 : i32
    %c0_i32_0 = arith.constant 0 : i32
    %c0_i32_1 = arith.constant 0 : i32
    return %c0_i32, %c0_i32_0 : i32, i32
  }
  func.func @transform_3(%arg0: i32, %arg1: i32) -> (i32, i32) {
    %c0_i32 = arith.constant 0 : i32
    %c0_i32_0 = arith.constant 0 : i32
    return %arg0, %c0_i32 : i32, i32
  }
}

</mosaic_0001>

<llo_original>
// kernel: tpu_custom_call.1
$region0: #{tpu_custom_call.1}
  #allocation0 [shape = 'u32[]', space=smem, size = 0x4, offset = 0x4, fixed_abs, tag = 'smem constant byte address 0x4 - core index']
  #allocation1 [shape = 'u32[144,128]{1,0:T(1,128)}', space=vmem, size = 0x12000, scoped, tag = 'internal scratch']
  #allocation2 [shape = 'f32[8,1]{1,0:T(8,128)}', space=vmem, size = 0x1000, scoped, tag = 'scratch operand']
  #allocation3 [shape = 'f32[1,1]{1,0:T(1,128)S(6)}', space=smem, size = 0x200, scoped, tag = 'scoped memory for tpu_custom_call.1']
  %s0 = inlined_call_operand.hbm [shape: bf16[16,32,128], index: 0, kind: input, shape index: {}]
  %s1 = inlined_call_operand.hbm [shape: f32[16,128], index: 1, kind: input, shape index: {}]
  %s2 = inlined_call_operand.<no memory space> [shape: f32[1,1], index: 2, kind: input, shape index: {}]
  %s3 = inlined_call_operand.vmem [shape: f32[16,1], index: 3, kind: output, shape index: {}]
  %s4 = sld [smem:[#allocation0]]
  $region61: #{tpu_custom_call.1} parent=0
    _
  %s6 = ssub.s32 1, %s4
  %s7 = scalar_select 0, %s6, %s4
  %8 = sst [smem:[#allocation3]] %s2
  $region1: #{tpu_custom_call.1} parent=0
    #allocation4 [shape = 'u8[131072]{0}', space=vmem, size = 0x20000, scoped, tag = 'input window, operand 0']
    #allocation5 [shape = 's32[2]{0}', space=sflag, size = 0x8, scoped, tag = 'scoped memory for tpu_custom_call.1']
    #allocation6 [shape = 'u8[8192]{0}', space=vmem, size = 0x2000, scoped, tag = 'input window, operand 1']
    #allocation7 [shape = 's32[2]{0}', space=sflag, size = 0x8, scoped, tag = 'scoped memory for tpu_custom_call.1']
    %9 = vsyncpa [#allocation5], 0
    %s10 = scalar_lea.sflag [#allocation5], 1
    %11 = vsyncpa %s10, 0
    %12 = vsyncpa [#allocation7], 0
    %s13 = scalar_lea.sflag [#allocation7], 1
    %14 = vsyncpa %s13, 0
    loop: start=0, step=1, limit=4
    $region2: #{tpu_custom_call.1} parent=1 // loop_pre_header
      _
    $region3: #{tpu_custom_call.1} parent=1 // loop_header
      %s16 = sphi 0, %s20
      %p17 = scmp.ge.s32.totalorder %s16, 4
      %s23 = sphi 0, %s35
      %s24 = sphi 0, %s31
      %s25 = sphi 0, %s23
      %s26 = sphi 0, %s24
      %s27 = sphi 0, %s25
      %s28 = sphi 0, %s26
      %s40 = sphi 0, %s42
      %s43 = sphi 0, %s40
      %s44 = sphi 0, %s43
      %s60 = sphi 0, %s44
      %s66 = sphi 0, %s68
      %s69 = sphi 0, %s66
      %s70 = sphi 0, %s69
      %s86 = sphi 0, %s70
      %s90 = sphi 0, %s90
      %s92 = sphi 0, %s90
      %s93 = sphi 0, %s92
      %s107 = sphi 0, %s93
      %s113 = sphi 0, %s115
      %s116 = sphi 0, %s113
      %s117 = sphi 0, %s116
      %s133 = sphi 0, %s117
    $region4: #{tpu_custom_call.1} parent=1 // loop_header_branch
      %19 = sbr.rel (%p17) target = $region8
    $region5: #{tpu_custom_call.1} parent=1 // loop_body
      %s21 = ssub.s32 %s16, 1
      %s22 = ssub.s32 %s16, 2
      %s29 = sadd.s32 1, %s24
      %p30 = scmp.ge.s32.totalorder %s29, 1
      %s31 = scalar_select %p30, 0, %s29
      %s32 = sadd.s32 1, %s23
      %s33 = scalar_select %p30, %s32, %s23
      %p34 = scmp.ge.s32.totalorder %s33, 2
      %s35 = scalar_select %p34, 0, %s33
      %s36 = ssub.s32 %s23, %s35
      %s37 = ssub.s32 %s24, %s31
      %s38 = sor.u32 %s36, %s37
      %p39 = scmp.eq.s32.totalorder %s38, 0
      %s41 = sadd.s32 %s40, 1
      %s42 = scalar_select %p39, %s40, %s41
      %p45 = pneg %p39
      %p46 = scmp.eq.s32.totalorder %s16, 1
      %p47 = por %p45, %p46
      %p48 = scmp.ne.s32.totalorder %s40, %s43
      %p49 = scmp.eq.s32.totalorder %s16, 0
      %p50 = por %p48, %p49
      %p51 = scmp.ne.s32.totalorder %s40, %s43
      %p52 = scmp.eq.s32.totalorder %s21, 1
      %p53 = por %p51, %p52
      %p54 = scmp.ne.s32.totalorder %s43, %s44
      %p55 = scmp.eq.s32.totalorder %s21, 0
      %p56 = por %p54, %p55
      %p57 = scmp.ne.s32.totalorder %s43, %s44
      %p58 = scmp.eq.s32.totalorder %s22, 1
      %p59 = por %p57, %p58
      %p61 = scmp.ne.s32.totalorder %s44, %s60
      %p62 = scmp.eq.s32.totalorder %s22, 0
      %p63 = por %p61, %p62
      %s64 = ssub.s32 %s23, %s35
      %p65 = scmp.eq.s32.totalorder %s64, 0
      %s67 = sadd.s32 %s66, 1
      %s68 = scalar_select %p65, %s66, %s67
      %p71 = pneg %p65
      %p72 = scmp.eq.s32.totalorder %s16, 1
      %p73 = por %p71, %p72
      %p74 = scmp.ne.s32.totalorder %s66, %s69
      %p75 = scmp.eq.s32.totalorder %s16, 0
      %p76 = por %p74, %p75
      %p77 = scmp.ne.s32.totalorder %s66, %s69
      %p78 = scmp.eq.s32.totalorder %s21, 1
      %p79 = por %p77, %p78
      %p80 = scmp.ne.s32.totalorder %s69, %s70
      %p81 = scmp.eq.s32.totalorder %s21, 0
      %p82 = por %p80, %p81
      %p83 = scmp.ne.s32.totalorder %s69, %s70
      %p84 = scmp.eq.s32.totalorder %s22, 1
      %p85 = por %p83, %p84
      %p87 = scmp.ne.s32.totalorder %s70, %s86
      %p88 = scmp.eq.s32.totalorder %s22, 0
      %p89 = por %p87, %p88
      %s91 = sadd.s32 %s90, 1
      %p94 = scmp.eq.s32.totalorder %s16, 1
      %p95 = scmp.ne.s32.totalorder %s90, %s92
      %p96 = scmp.eq.s32.totalorder %s16, 0
      %p97 = por %p95, %p96
      %p98 = scmp.ne.s32.totalorder %s90, %s92
      %p99 = scmp.eq.s32.totalorder %s21, 1
      %p100 = por %p98, %p99
      %p101 = scmp.ne.s32.totalorder %s92, %s93
      %p102 = scmp.eq.s32.totalorder %s21, 0
      %p103 = por %p101, %p102
      %p104 = scmp.ne.s32.totalorder %s92, %s93
      %p105 = scmp.eq.s32.totalorder %s22, 1
      %p106 = por %p104, %p105
      %p108 = scmp.ne.s32.totalorder %s93, %s107
      %p109 = scmp.eq.s32.totalorder %s22, 0
      %p110 = por %p108, %p109
      %s111 = ssub.s32 %s23, %s35
      %p112 = scmp.eq.s32.totalorder %s111, 0
      %s114 = sadd.s32 %s113, 1
      %s115 = scalar_select %p112, %s113, %s114
      %p118 = pneg %p112
      %p119 = scmp.eq.s32.totalorder %s16, 1
      %p120 = por %p118, %p119
      %p121 = scmp.ne.s32.totalorder %s113, %s116
      %p122 = scmp.eq.s32.totalorder %s16, 0
      %p123 = por %p121, %p122
      %p124 = scmp.ne.s32.totalorder %s113, %s116
      %p125 = scmp.eq.s32.totalorder %s21, 1
      %p126 = por %p124, %p125
      %p127 = scmp.ne.s32.totalorder %s116, %s117
      %p128 = scmp.eq.s32.totalorder %s21, 0
      %p129 = por %p127, %p128
      %p130 = scmp.ne.s32.totalorder %s116, %s117
      %p131 = scmp.eq.s32.totalorder %s22, 1
      %p132 = por %p130, %p131
      %p134 = scmp.ne.s32.totalorder %s117, %s133
      %p135 = scmp.eq.s32.totalorder %s22, 0
      %p136 = por %p134, %p135
      %p137 = scmp.le.s32.totalorder 1, %s16
      %p138 = scmp.lt.s32.totalorder %s16, 3
      %p139 = pnand %p137, %p138
      %p140 = pneg %p139
      // Predicated region
      $region9: #{tpu_custom_call.1} parent=5 // pred_check
        _
      $region10: #{tpu_custom_call.1} parent=5 // pred_check_branch
        %142 = sbr.rel (%p139) target = $region12
      $region11: #{tpu_custom_call.1} parent=5 // pred_region
        %s143 = ssub.s32 %s16, 1
        // Predicated region
        $region13: #{tpu_custom_call.1} parent=11 // pred_check
          %p144 = pneg %p103
        $region14: #{tpu_custom_call.1} parent=11 // pred_check_branch
          %146 = sbr.rel (%p144) target = $region16
        $region15: #{tpu_custom_call.1} parent=11 // pred_region
          _
        $region16: #{tpu_custom_call.1} parent=11 // pred_fallthru
          _
      $region12: #{tpu_custom_call.1} parent=5 // pred_fallthru
        _
      %p147 = scmp.lt.s32.totalorder %s16, 2
      // Predicated region
      $region17: #{tpu_custom_call.1} parent=5 // pred_check
        %p148 = pneg %p147
      $region18: #{tpu_custom_call.1} parent=5 // pred_check_branch
        %150 = sbr.rel (%p148) target = $region20
      $region19: #{tpu_custom_call.1} parent=5 // pred_region
        // Predicated region
        $region21: #{tpu_custom_call.1} parent=19 // pred_check
          %p151 = pneg %p50
        $region22: #{tpu_custom_call.1} parent=19 // pred_check_branch
          %153 = sbr.rel (%p151) target = $region24
        $region23: #{tpu_custom_call.1} parent=19 // pred_region
          %s154 = sand.u32 %s40, 1
          %s155 = scalar_lea.sflag [#allocation5], %s154
          %s156 = sand.u32 %s40, 1
          %s157 = smul.addr %s156, 128
          %s158 = scalar_lea.vmem [#allocation4], %s157
          %s159 = smul.u32 8, %s23
          %s160 = smul.u32 4, %s24
          %s162 = ssub.s32 2048, 2048
          %163 = vsyncadd %s155, %s162
          %s164 = smul.addr %s159, 4
          %s165 = sadd.s32 %s160, %s164
          %s166 = smul.addr %s165, 64
          %s167 = scalar_lea.hbm %s0, %s166
          %s168 = sshll.u32 %s158, 4
          %s169 = int_to_ptr.vmem [resolvable:$true] %s168
          %174 = dma.hbm_to_vmem [thread:$0]  %s167, 2048, %s169, %s155, 64, 64, 4
        $region24: #{tpu_custom_call.1} parent=19 // pred_fallthru
          _
        // Predicated region
        $region25: #{tpu_custom_call.1} parent=19 // pred_check
          %p175 = pneg %p76
        $region26: #{tpu_custom_call.1} parent=19 // pred_check_branch
          %177 = sbr.rel (%p175) target = $region28
        $region27: #{tpu_custom_call.1} parent=19 // pred_region
          %s178 = sand.u32 %s66, 1
          %s179 = scalar_lea.sflag [#allocation7], %s178
          %s180 = sand.u32 %s66, 1
          %s181 = smul.addr %s180, 8
          %s182 = scalar_lea.vmem [#allocation6], %s181
          %s184 = ssub.s32 128, 128
          %185 = vsyncadd %s179, %s184
          %s186 = smul.addr %s23, 128
          %s187 = scalar_lea.hbm %s1, %s186
          %s189 = sshll.u32 %s182, 4
          %s190 = int_to_ptr.vmem [resolvable:$true] %s189
          %192 = dma.hbm_to_vmem [thread:$0]  %s187, 128, %s190, %s179
        $region28: #{tpu_custom_call.1} parent=19 // pred_fallthru
          _
      $region20: #{tpu_custom_call.1} parent=5 // pred_fallthru
        _
      %p193 = scmp.le.s32.totalorder 1, %s16
      %p194 = scmp.lt.s32.totalorder %s16, 3
      %p195 = pnand %p193, %p194
      %p196 = pneg %p195
      // Predicated region
      $region29: #{tpu_custom_call.1} parent=5 // pred_check
        _
      $region30: #{tpu_custom_call.1} parent=5 // pred_check_branch
        %198 = sbr.rel (%p195) target = $region32
      $region31: #{tpu_custom_call.1} parent=5 // pred_region
        %s199 = ssub.s32 %s16, 1
        %s200 = sand.u32 %s43, 1
        %s201 = scalar_lea.sflag [#allocation5], %s200
        %s202 = sand.u32 %s43, 1
        %s203 = smul.addr %s202, 128
        %s204 = scalar_lea.vmem [#allocation4], %s203
        // Predicated region
        $region33: #{tpu_custom_call.1} parent=31 // pred_check
          %p205 = pneg %p56
        $region34: #{tpu_custom_call.1} parent=31 // pred_check_branch
          %207 = sbr.rel (%p205) target = $region36
        $region35: #{tpu_custom_call.1} parent=31 // pred_region
          %208 = dma.done %s201, 2048
        $region36: #{tpu_custom_call.1} parent=31 // pred_fallthru
          _
        %s209 = sand.u32 %s69, 1
        %s210 = scalar_lea.sflag [#allocation7], %s209
        %s211 = sand.u32 %s69, 1
        %s212 = smul.addr %s211, 8
        %s213 = scalar_lea.vmem [#allocation6], %s212
        // Predicated region
        $region37: #{tpu_custom_call.1} parent=31 // pred_check
          %p214 = pneg %p82
        $region38: #{tpu_custom_call.1} parent=31 // pred_check_branch
          %216 = sbr.rel (%p214) target = $region40
        $region39: #{tpu_custom_call.1} parent=31 // pred_region
          %217 = dma.done %s210, 128
        $region40: #{tpu_custom_call.1} parent=31 // pred_fallthru
          _
        %s218 = sand.u32 %s43, 1
        %s219 = scalar_lea.sflag [#allocation5], %s218
        %s220 = sand.u32 %s43, 1
        %s221 = smul.addr %s220, 128
        %s222 = scalar_lea.vmem [#allocation4], %s221
        %p223 = pneg %p56
        %p224 = pneg %p53
        %s225 = sand.u32 %s69, 1
        %s226 = scalar_lea.sflag [#allocation7], %s225
        %s227 = sand.u32 %s69, 1
        %s228 = smul.addr %s227, 8
        %s229 = scalar_lea.vmem [#allocation6], %s228
        %p230 = pneg %p82
        %p231 = pneg %p79
        %p232 = pneg %p103
        %p233 = pneg %p100
        %p234 = pneg %p129
        %p235 = pneg %p126
        %p236 = scmp.lt.s32.totalorder %s25, 1
        %s237 = scalar_select %p236, %s25, 1
        %s238 = smul.addr %s237, 8
        %s239 = scalar_lea.vmem %s3, %s238
        %s240 = smul.u32 8, %s25
        %s241 = smul.u32 4, %s26
        %p242 = scmp.lt.s32.totalorder %s25, 1
        %s243 = scalar_select %p242, %s25, 1
        %s244 = smul.addr %s243, 8
        %s245 = scalar_lea.vmem %s3, %s244
        %p246 = scmp.eq.s32.totalorder %s26, 0
        // Predicated region
        $region41: #{tpu_custom_call.1} parent=31 // pred_check
          %p247 = pneg %p246
        $region42: #{tpu_custom_call.1} parent=31 // pred_check_branch
          %249 = sbr.rel (%p247) target = $region44
        $region43: #{tpu_custom_call.1} parent=31 // pred_region
          %vm250 = vcmask 7168
          %251 = vst.msk [vmem:[#allocation2] sm:$0xff] %vm250, 0.0
        $region44: #{tpu_custom_call.1} parent=31 // pred_fallthru
          _
        %v252 = vld [vmem:[%s204] sm:$0xf]
        %v253 = vld [vmem:[%s204 + $0x4] sm:$0xf]
        %v254 = vld [vmem:[%s204 + $0x8] sm:$0xf]
        %v255 = vld [vmem:[%s204 + $0xc] sm:$0xf]
        %v256 = vld [vmem:[%s204 + $0x10] sm:$0xf]
        %v257 = vld [vmem:[%s204 + $0x14] sm:$0xf]
        %v258 = vld [vmem:[%s204 + $0x18] sm:$0xf]
        %v259 = vld [vmem:[%s204 + $0x1c] sm:$0xf]
        %v260 = vld [vmem:[%s204 + $0x20] sm:$0xf]
        %v261 = vld [vmem:[%s204 + $0x24] sm:$0xf]
        %v262 = vld [vmem:[%s204 + $0x28] sm:$0xf]
        %v263 = vld [vmem:[%s204 + $0x2c] sm:$0xf]
        %v264 = vld [vmem:[%s204 + $0x30] sm:$0xf]
        %v265 = vld [vmem:[%s204 + $0x34] sm:$0xf]
        %v266 = vld [vmem:[%s204 + $0x38] sm:$0xf]
        %v267 = vld [vmem:[%s204 + $0x3c] sm:$0xf]
        %v268 = vld [vmem:[%s204 + $0x40] sm:$0xf]
        %v269 = vld [vmem:[%s204 + $0x44] sm:$0xf]
        %v270 = vld [vmem:[%s204 + $0x48] sm:$0xf]
        %v271 = vld [vmem:[%s204 + $0x4c] sm:$0xf]
        %v272 = vld [vmem:[%s204 + $0x50] sm:$0xf]
        %v273 = vld [vmem:[%s204 + $0x54] sm:$0xf]
        %v274 = vld [vmem:[%s204 + $0x58] sm:$0xf]
        %v275 = vld [vmem:[%s204 + $0x5c] sm:$0xf]
        %v276 = vld [vmem:[%s204 + $0x60] sm:$0xf]
        %v277 = vld [vmem:[%s204 + $0x64] sm:$0xf]
        %v278 = vld [vmem:[%s204 + $0x68] sm:$0xf]
        %v279 = vld [vmem:[%s204 + $0x6c] sm:$0xf]
        %v280 = vld [vmem:[%s204 + $0x70] sm:$0xf]
        %v281 = vld [vmem:[%s204 + $0x74] sm:$0xf]
        %v282 = vld [vmem:[%s204 + $0x78] sm:$0xf]
        %v283 = vld [vmem:[%s204 + $0x7c] sm:$0xf]
        %v284 = vunpack.c.l.bf16 %v252
        %v285 = vunpack.c.l.bf16 %v253
        %v286 = vunpack.c.l.bf16 %v254
        %v287 = vunpack.c.l.bf16 %v255
        %v288 = vunpack.c.l.bf16 %v256
        %v289 = vunpack.c.l.bf16 %v257
        %v290 = vunpack.c.l.bf16 %v258
        %v291 = vunpack.c.l.bf16 %v259
        %v292 = vunpack.c.l.bf16 %v260
        %v293 = vunpack.c.l.bf16 %v261
        %v294 = vunpack.c.l.bf16 %v262
        %v295 = vunpack.c.l.bf16 %v263
        %v296 = vunpack.c.l.bf16 %v264
        %v297 = vunpack.c.l.bf16 %v265
        %v298 = vunpack.c.l.bf16 %v266
        %v299 = vunpack.c.l.bf16 %v267
        %v300 = vunpack.c.l.bf16 %v268
        %v301 = vunpack.c.l.bf16 %v269
        %v302 = vunpack.c.l.bf16 %v270
        %v303 = vunpack.c.l.bf16 %v271
        %v304 = vunpack.c.l.bf16 %v272
        %v305 = vunpack.c.l.bf16 %v273
        %v306 = vunpack.c.l.bf16 %v274
        %v307 = vunpack.c.l.bf16 %v275
        %v308 = vunpack.c.l.bf16 %v276
        %v309 = vunpack.c.l.bf16 %v277
        %v310 = vunpack.c.l.bf16 %v278
        %v311 = vunpack.c.l.bf16 %v279
        %v312 = vunpack.c.l.bf16 %v280
        %v313 = vunpack.c.l.bf16 %v281
        %v314 = vunpack.c.l.bf16 %v282
        %v315 = vunpack.c.l.bf16 %v283
        %v316 = vadd.f32 %v284, %v285
        %v317 = vadd.f32 %v316, %v286
        %v318 = vadd.f32 %v317, %v287
        %v319 = vrot.slane %v318, 4
        %v320 = vadd.f32 %v318, %v319
        %v321 = vrot.slane %v320, 2
        %v322 = vadd.f32 %v320, %v321
        %v323 = vrot.slane %v322, 1
        %v324 = vadd.f32 %v322, %v323
        %v325 = vadd.f32 %v288, %v289
        %v326 = vadd.f32 %v325, %v290
        %v327 = vadd.f32 %v326, %v291
        %v328 = vrot.slane %v327, 4
        %v329 = vadd.f32 %v327, %v328
        %v330 = vrot.slane %v329, 2
        %v331 = vadd.f32 %v329, %v330
        %v332 = vrot.slane %v331, 1
        %v333 = vadd.f32 %v331, %v332
        %v334 = vadd.f32 %v292, %v293
        %v335 = vadd.f32 %v334, %v294
        %v336 = vadd.f32 %v335, %v295
        %v337 = vrot.slane %v336, 4
        %v338 = vadd.f32 %v336, %v337
        %v339 = vrot.slane %v338, 2
        %v340 = vadd.f32 %v338, %v339
        %v341 = vrot.slane %v340, 1
        %v342 = vadd.f32 %v340, %v341
        %v343 = vadd.f32 %v296, %v297
        %v344 = vadd.f32 %v343, %v298
        %v345 = vadd.f32 %v344, %v299
        %v346 = vrot.slane %v345, 4
        %v347 = vadd.f32 %v345, %v346
        %v348 = vrot.slane %v347, 2
        %v349 = vadd.f32 %v347, %v348
        %v350 = vrot.slane %v349, 1
        %v351 = vadd.f32 %v349, %v350
        %v352 = vadd.f32 %v300, %v301
        %v353 = vadd.f32 %v352, %v302
        %v354 = vadd.f32 %v353, %v303
        %v355 = vrot.slane %v354, 4
        %v356 = vadd.f32 %v354, %v355
        %v357 = vrot.slane %v356, 2
        %v358 = vadd.f32 %v356, %v357
        %v359 = vrot.slane %v358, 1
        %v360 = vadd.f32 %v358, %v359
        %v361 = vadd.f32 %v304, %v305
        %v362 = vadd.f32 %v361, %v306
        %v363 = vadd.f32 %v362, %v307
        %v364 = vrot.slane %v363, 4
        %v365 = vadd.f32 %v363, %v364
        %v366 = vrot.slane %v365, 2
        %v367 = vadd.f32 %v365, %v366
        %v368 = vrot.slane %v367, 1
        %v369 = vadd.f32 %v367, %v368
        %v370 = vadd.f32 %v308, %v309
        %v371 = vadd.f32 %v370, %v310
        %v372 = vadd.f32 %v371, %v311
        %v373 = vrot.slane %v372, 4
        %v374 = vadd.f32 %v372, %v373
        %v375 = vrot.slane %v374, 2
        %v376 = vadd.f32 %v374, %v375
        %v377 = vrot.slane %v376, 1
        %v378 = vadd.f32 %v376, %v377
        %v379 = vadd.f32 %v312, %v313
        %v380 = vadd.f32 %v379, %v314
        %v381 = vadd.f32 %v380, %v315
        %v382 = vrot.slane %v381, 4
        %v383 = vadd.f32 %v381, %v382
        %v384 = vrot.slane %v383, 2
        %v385 = vadd.f32 %v383, %v384
        %v386 = vrot.slane %v385, 1
        %v387 = vadd.f32 %v385, %v386
        %v388 = vld [vmem:[#allocation2] sm:$0xff]
        %v389 = vld [vmem:[%s213] sm:$0xff]
        %v391 = vrot.slane %v389, 1
        %v392 = vrot.slane %v389, 2
        %v393 = vrot.slane %v389, 3
        %v394 = vrot.slane %v389, 4
        %v395 = vrot.slane %v389, 5
        %v396 = vrot.slane %v389, 6
        %v397 = vrot.slane %v389, 7
        %v406 = vmul.f32 %v324, %v389
        %v407 = vmul.f32 %v333, %v391
        %v408 = vmul.f32 %v342, %v392
        %v409 = vmul.f32 %v351, %v393
        %v410 = vmul.f32 %v360, %v394
        %v411 = vmul.f32 %v369, %v395
        %v412 = vmul.f32 %v378, %v396
        %v413 = vmul.f32 %v387, %v397
        %v422 = vrot.slane %v407, 7
        %vm423 = vcmask 1041409
        %v424 = vsel %vm423, %v422, %v406
        %v425 = vrot.slane %v408, 6
        %vm426 = vcmask 1042434
        %v427 = vsel %vm426, %v425, %v424
        %v428 = vrot.slane %v409, 5
        %vm429 = vcmask 1043459
        %v430 = vsel %vm429, %v428, %v427
        %v431 = vrot.slane %v410, 4
        %vm432 = vcmask 1044484
        %v433 = vsel %vm432, %v431, %v430
        %v434 = vrot.slane %v411, 3
        %vm435 = vcmask 1045509
        %v436 = vsel %vm435, %v434, %v433
        %v437 = vrot.slane %v412, 2
        %vm438 = vcmask 1046534
        %v439 = vsel %vm438, %v437, %v436
        %v440 = vrot.slane %v413, 1
        %vm441 = vcmask 1047559
        %v442 = vsel %vm441, %v440, %v439
        %444 = vadd.xlane.f32.xlu0 %v442
        %v445 = vpop.xlane.xlu0 %444
        %v446 = vadd.f32 %v388, %v445
        %vm447 = vcmask 7168
        %448 = vst.msk [vmem:[#allocation2] sm:$0xff] %vm447, %v446
        // Predicated region
        $region45: #{tpu_custom_call.1} parent=31 // pred_check
          %p449 = pneg %p246
        $region46: #{tpu_custom_call.1} parent=31 // pred_check_branch
          %451 = sbr.rel (%p449) target = $region48
        $region47: #{tpu_custom_call.1} parent=31 // pred_region
          %v452 = vld [vmem:[#allocation2] sm:$0xff]
          %s453 = sld [smem:[#allocation3]]
          %v454 = vstv %s453
          %v455 = vadd.f32 %v452, %v454
          %456 = vst.msk [vmem:[%s245] sm:$0xff] %vm447, %v455
        $region48: #{tpu_custom_call.1} parent=31 // pred_fallthru
          _
        %p457 = scmp.lt.s32.totalorder %s25, 1
        %s458 = scalar_select %p457, %s25, 1
        %s459 = smul.addr %s458, 8
        %s460 = scalar_lea.vmem %s3, %s459
        // Predicated region
        $region49: #{tpu_custom_call.1} parent=31 // pred_check
          %p461 = pneg %p126
        $region50: #{tpu_custom_call.1} parent=31 // pred_check_branch
          %463 = sbr.rel (%p461) target = $region52
        $region51: #{tpu_custom_call.1} parent=31 // pred_region
          _
        $region52: #{tpu_custom_call.1} parent=31 // pred_fallthru
          _
      $region32: #{tpu_custom_call.1} parent=5 // pred_fallthru
        _
      %p464 = scmp.le.s32.totalorder 2, %s16
      // Predicated region
      $region53: #{tpu_custom_call.1} parent=5 // pred_check
        %p465 = pneg %p464
      $region54: #{tpu_custom_call.1} parent=5 // pred_check_branch
        %467 = sbr.rel (%p465) target = $region56
      $region55: #{tpu_custom_call.1} parent=5 // pred_region
        %s468 = ssub.s32 %s16, 2
        // Predicated region
        $region57: #{tpu_custom_call.1} parent=55 // pred_check
          %p469 = pneg %p132
        $region58: #{tpu_custom_call.1} parent=55 // pred_check_branch
          %471 = sbr.rel (%p469) target = $region60
        $region59: #{tpu_custom_call.1} parent=55 // pred_region
          %p472 = scmp.lt.s32.totalorder %s27, 1
          %s473 = scalar_select %p472, %s27, 1
          %s474 = smul.addr %s473, 8
          %s475 = scalar_lea.vmem %s3, %s474
        $region60: #{tpu_custom_call.1} parent=55 // pred_fallthru
          _
      $region56: #{tpu_custom_call.1} parent=5 // pred_fallthru
        _
    $region6: #{tpu_custom_call.1} parent=1 // loop_footer
      %s20 = sadd.s32 1, %s16
    $region7: #{tpu_custom_call.1} parent=1 // loop_footer_branch
      %15 = sbr.rel target = $region3
    $region8: #{tpu_custom_call.1} parent=1 // loop_exit
      _
    %476 = vsyncpa [#allocation5], 1
    %s477 = scalar_lea.sflag [#allocation5], 1
    %478 = vsyncpa %s477, 1
    %479 = vsyncpa [#allocation7], 1
    %s480 = scalar_lea.sflag [#allocation7], 1
    %481 = vsyncpa %s480, 1

</llo_original>
